<compile_context>
chip_gen: v5e
topology: v5e:2x2
jax: 0.10.0
libtpu: 0.0.40
codegen_flags: <defaults>
</compile_context>

<pallas_src>
import jax
import jax.numpy as jnp
from jax.experimental import pallas as pl
from jax.experimental.pallas import tpu as pltpu


def bert_entity_kernel(hid_ref,    # VMEM (TB, L, H)  bf16
                       pos1_ref,   # VMEM (TB, 1)     int32
                       pos2_ref,   # VMEM (TB, 1)     int32
                       w_ref,      # VMEM (2H, 2H)    bf16   (stored as in_features x out_features)
                       b_ref,      # VMEM (1, 2H)     f32
                       out_ref):   # VMEM (TB, 2H)    f32
    TB, L, H = hid_ref.shape

    hid = hid_ref[...].astype(jnp.float32)                        # (TB, L, H)
    lane = jax.lax.broadcasted_iota(jnp.int32, (TB, L), 1)        # (TB, L)

    # torch scatter_(1, pos, 1) -> exactly-one-hot per row.
    m_head = (lane == pos1_ref[...]).astype(jnp.float32)          # (TB, L)
    m_tail = (lane == pos2_ref[...]).astype(jnp.float32)

    # Masked row selection on the VPU (sublane reduction), no M=1 MXU pushes.
    head = jnp.sum(m_head[:, :, None] * hid, axis=1)              # (TB, H) f32 (exact pick)
    tail = jnp.sum(m_tail[:, :, None] * hid, axis=1)              # (TB, H)

    head_b = head.astype(jnp.bfloat16)                            # lossless (values came from bf16)
    tail_b = tail.astype(jnp.bfloat16)

    # cat([head, tail], -1) @ W + b  ==  head @ W[:H] + tail @ W[H:] + b
    # (slice the Ref directly; weight streams from VMEM into the MXU).
    out = (jnp.dot(head_b, w_ref[0:H, :], preferred_element_type=jnp.float32)
           + jnp.dot(tail_b, w_ref[H:2 * H, :], preferred_element_type=jnp.float32)
           + b_ref[...])                                          # (TB, 2H) f32

    out_ref[...] = out


def bert_entity_pallas(hidden_bf16, pos1, pos2, w_bf16, bias_f32):
    """hidden_bf16: (B, L, H) bf16; pos1/pos2: (B, 1) int32; w: (2H, 2H) bf16; b: (1, 2H) f32."""
    B, L, H = hidden_bf16.shape
    H2 = 2 * H
    assert w_bf16.shape == (H2, H2) and bias_f32.shape == (1, H2)

    # Pad batch to a sublane multiple so the M dimension of the matmul is aligned.
    BP = ((B + 7) // 8) * 8
    pad = BP - B
    if pad:
        hidden_bf16 = jnp.pad(hidden_bf16, ((0, pad), (0, 0), (0, 0)))
        pos1 = jnp.pad(pos1, ((0, pad), (0, 0)))
        pos2 = jnp.pad(pos2, ((0, pad), (0, 0)))

    # Whole (padded) batch per grid step at this scale; at production scale set
    # TB to 128 (v5e) / 256 (v6e, v7x) and the grid tiles the batch.
    TB = BP
    grid = (BP // TB,)

    out = pl.pallas_call(
        bert_entity_kernel,
        out_shape=jax.ShapeDtypeStruct((BP, H2), jnp.float32),
        grid=grid,
        in_specs=[
            pl.BlockSpec((TB, L, H), lambda i: (i, 0, 0)),
            pl.BlockSpec((TB, 1), lambda i: (i, 0)),
            pl.BlockSpec((TB, 1), lambda i: (i, 0)),
            pl.BlockSpec((H2, H2), lambda i: (0, 0)),   # grid-invariant weight
            pl.BlockSpec((1, H2), lambda i: (0, 0)),
        ],
        out_specs=pl.BlockSpec((TB, H2), lambda i: (i, 0)),
        compiler_params=pltpu.CompilerParams(
            dimension_semantics=("parallel",),          # independent batch tiles (megacore)
            vmem_limit_bytes=32 * 1024 * 1024),
    )(hidden_bf16, pos1, pos2, w_bf16, bias_f32)

    return out[:B]                                      # (B, 2H) f32


def bert_entity_forward(token, att_mask, pos1, pos2, params):
    """Mirrors BERTEntityEncoder.forward."""
    # TODO(synk): the pretrained HF BERT encoder (AutoModel) has no clean Pallas
    # equivalent here; `hidden` is produced by a deterministic embedding lookup
    # masked by att_mask (bf16 to halve HBM traffic into the kernel).
    hidden = params["emb"][token] * att_mask[..., None].astype(jnp.float32)   # (B, L, H)
    hidden_bf16 = hidden.astype(jnp.bfloat16)
    return bert_entity_pallas(hidden_bf16,
                              pos1.astype(jnp.int32), pos2.astype(jnp.int32),
                              params["w"], params["b"])


def reference_forward(token, att_mask, pos1, pos2, params):
    """Pure-JAX reference with the same bf16 casts as the kernel."""
    B, L = token.shape
    hidden = params["emb"][token] * att_mask[..., None].astype(jnp.float32)
    hid = hidden.astype(jnp.bfloat16).astype(jnp.float32)
    rows = jnp.arange(B)
    oh_head = jnp.zeros((B, L)).at[rows, pos1[:, 0]].set(1.0)
    oh_tail = jnp.zeros((B, L)).at[rows, pos2[:, 0]].set(1.0)
    head = (oh_head[:, :, None] * hid).sum(1)
    tail = (oh_tail[:, :, None] * hid).sum(1)
    x = jnp.concatenate([head, tail], axis=1).astype(jnp.bfloat16)
    return jnp.dot(x, params["w"], preferred_element_type=jnp.float32) + params["b"][0]


if __name__ == "__main__":
    # Small stand-ins for (batch, max_length=128, bert_hidden=768, 2H=1536)
    B, L, H = 2, 16, 128
    H2 = 2 * H
    VOCAB = 64

    key = jax.random.PRNGKey(0)
    keys = jax.random.split(key, 6)

    # torch Linear(2H, 2H): weight (out, in); stored transposed so kernel does x @ W + b.
    params = {
        "emb": jax.random.normal(keys[0], (VOCAB, H), jnp.float32) * 0.5,
        "w": (jax.random.normal(keys[1], (H2, H2), jnp.float32) * 0.05).astype(jnp.bfloat16),
        "b": jax.random.normal(keys[2], (1, H2), jnp.float32) * 0.05,
    }

    token = jax.random.randint(keys[3], (B, L), 0, VOCAB, jnp.int32)
    att_mask = jnp.concatenate(
        [jnp.ones((B, L - 4), jnp.int32), jnp.zeros((B, 4), jnp.int32)], axis=1)
    pos1 = jnp.array([[2], [5]], jnp.int32)   # (B, 1) head entity position
    pos2 = jnp.array([[7], [1]], jnp.int32)   # (B, 1) tail entity position

    out = bert_entity_forward(token, att_mask, pos1, pos2, params)
    out = jax.block_until_ready(out)

    ref = reference_forward(token, att_mask, pos1, pos2, params)
    assert out.shape == (B, H2), out.shape
    assert jnp.allclose(out, ref, atol=1e-3, rtol=1e-3), (out, ref)
    print("KERNEL_OK")
</pallas_src>

<mosaic_0001>
module attributes {stable_mosaic.version = 11 : i64} {
  func.func @bert_entity_kernel(%arg0: i32, %arg1: memref<8x16x128xbf16, #tpu.memory_space<vmem>>, %arg2: memref<8x1xi32, #tpu.memory_space<vmem>>, %arg3: memref<8x1xi32, #tpu.memory_space<vmem>>, %arg4: memref<256x256xbf16, #tpu.memory_space<vmem>>, %arg5: memref<1x256xf32, #tpu.memory_space<vmem>>, %arg6: memref<8x256xf32, #tpu.memory_space<vmem>>) attributes {dimension_semantics = [#tpu.dimension_semantics<parallel>], iteration_bounds = array<i64: 1>, scalar_prefetch = 0 : i64, scratch_operands = 0 : i64, tpu.core_type = #tpu.core_type<tc>, window_params = [{transform_indices = @transform_0, window_bounds = array<i64: 8, 16, 128>}, {transform_indices = @transform_1, window_bounds = array<i64: 8, 1>}, {transform_indices = @transform_2, window_bounds = array<i64: 8, 1>}, {pipeline_mode = #tpu.pipeline_mode<synchronous>, transform_indices = @transform_3, window_bounds = array<i64: 256, 256>}, {pipeline_mode = #tpu.pipeline_mode<synchronous>, transform_indices = @transform_4, window_bounds = array<i64: 1, 256>}, {transform_indices = @transform_5, window_bounds = array<i64: 8, 256>}]} {
    %c0 = arith.constant 0 : index
    %c0_0 = arith.constant 0 : index
    %c0_1 = arith.constant 0 : index
    %0 = vector.load %arg1[%c0, %c0_0, %c0_1] : memref<8x16x128xbf16, #tpu.memory_space<vmem>>, vector<8x16x128xbf16>
    %1 = arith.extf %0 : vector<8x16x128xbf16> to vector<8x16x128xf32>
    %2 = tpu.iota {dimensions = array<i32: 1>} : vector<8x16xi32>
    %c0_2 = arith.constant 0 : index
    %c0_3 = arith.constant 0 : index
    %3 = vector.load %arg2[%c0_2, %c0_3] : memref<8x1xi32, #tpu.memory_space<vmem>>, vector<8x1xi32>
    %4 = vector.broadcast %3 : vector<8x1xi32> to vector<8x16xi32>
    %5 = arith.cmpi eq, %2, %4 : vector<8x16xi32>
    %6 = arith.extui %5 : vector<8x16xi1> to vector<8x16xi32>
    %7 = arith.sitofp %6 : vector<8x16xi32> to vector<8x16xf32>
    %c0_4 = arith.constant 0 : index
    %c0_5 = arith.constant 0 : index
    %8 = vector.load %arg3[%c0_4, %c0_5] : memref<8x1xi32, #tpu.memory_space<vmem>>, vector<8x1xi32>
    %9 = vector.broadcast %8 : vector<8x1xi32> to vector<8x16xi32>
    %10 = arith.cmpi eq, %2, %9 : vector<8x16xi32>
    %11 = arith.extui %10 : vector<8x16xi1> to vector<8x16xi32>
    %12 = arith.sitofp %11 : vector<8x16xi32> to vector<8x16xf32>
    %13 = vector.shape_cast %7 : vector<8x16xf32> to vector<8x16x1xf32>
    %14 = vector.broadcast %13 : vector<8x16x1xf32> to vector<8x16x128xf32>
    %15 = arith.mulf %14, %1 : vector<8x16x128xf32>
    %cst = arith.constant dense<0.000000e+00> : vector<8x128xf32>
    %16 = vector.multi_reduction <add>, %15, %cst [1] : vector<8x16x128xf32> to vector<8x128xf32>
    %17 = vector.shape_cast %12 : vector<8x16xf32> to vector<8x16x1xf32>
    %18 = vector.broadcast %17 : vector<8x16x1xf32> to vector<8x16x128xf32>
    %19 = arith.mulf %18, %1 : vector<8x16x128xf32>
    %cst_6 = arith.constant dense<0.000000e+00> : vector<8x128xf32>
    %20 = vector.multi_reduction <add>, %19, %cst_6 [1] : vector<8x16x128xf32> to vector<8x128xf32>
    %21 = arith.truncf %16 : vector<8x128xf32> to vector<8x128xbf16>
    %22 = arith.truncf %20 : vector<8x128xf32> to vector<8x128xbf16>
    %c0_7 = arith.constant 0 : index
    %c0_8 = arith.constant 0 : index
    %23 = vector.load %arg4[%c0_7, %c0_8] : memref<256x256xbf16, #tpu.memory_space<vmem>>, vector<128x256xbf16>
    %cst_9 = arith.constant dense<0.000000e+00> : vector<8x256xf32>
    %24 = tpu.matmul %21, %23, %cst_9 {dimension_numbers = #tpu.dot_dimension_numbers<[1], [0], [0], [1], [0, 0, 1, 1], [], []>} : vector<8x128xbf16>, vector<128x256xbf16>, vector<8x256xf32> -> vector<8x256xf32>
    %c128 = arith.constant 128 : index
    %c0_10 = arith.constant 0 : index
    %25 = vector.load %arg4[%c128, %c0_10] : memref<256x256xbf16, #tpu.memory_space<vmem>>, vector<128x256xbf16>
    %cst_11 = arith.constant dense<0.000000e+00> : vector<8x256xf32>
    %26 = tpu.matmul %22, %25, %cst_11 {dimension_numbers = #tpu.dot_dimension_numbers<[1], [0], [0], [1], [0, 0, 1, 1], [], []>} : vector<8x128xbf16>, vector<128x256xbf16>, vector<8x256xf32> -> vector<8x256xf32>
    %27 = arith.addf %24, %26 : vector<8x256xf32>
    %c0_12 = arith.constant 0 : index
    %c0_13 = arith.constant 0 : index
    %28 = vector.load %arg5[%c0_12, %c0_13] : memref<1x256xf32, #tpu.memory_space<vmem>>, vector<1x256xf32>
    %29 = vector.broadcast %28 : vector<1x256xf32> to vector<8x256xf32>
    %30 = arith.addf %27, %29 : vector<8x256xf32>
    %c0_14 = arith.constant 0 : index
    %c0_15 = arith.constant 0 : index
    %31 = vector.load %arg6[%c0_14, %c0_15] : memref<8x256xf32, #tpu.memory_space<vmem>>, vector<8x256xf32>
    tpu.vector_store %arg6[%c0_14, %c0_15], %30 {strides = array<i32>} : memref<8x256xf32, #tpu.memory_space<vmem>>, vector<8x256xf32>,
    return
  }
  func.func @transform_0(%arg0: i32) -> (i32, i32, i32) {
    %c0_i32 = arith.constant 0 : i32
    %c0_i32_0 = arith.constant 0 : i32
    %c0_i32_1 = arith.constant 0 : i32
    return %arg0, %c0_i32, %c0_i32_0 : i32, i32, i32
  }
  func.func @transform_1(%arg0: i32) -> (i32, i32) {
    %c0_i32 = arith.constant 0 : i32
    %c0_i32_0 = arith.constant 0 : i32
    return %arg0, %c0_i32 : i32, i32
  }
  func.func @transform_2(%arg0: i32) -> (i32, i32) {
    %c0_i32 = arith.constant 0 : i32
    %c0_i32_0 = arith.constant 0 : i32
    return %arg0, %c0_i32 : i32, i32
  }
  func.func @transform_3(%arg0: i32) -> (i32, i32) {
    %c0_i32 = arith.constant 0 : i32
    %c0_i32_0 = arith.constant 0 : i32
    %c0_i32_1 = arith.constant 0 : i32
    return %c0_i32, %c0_i32_0 : i32, i32
  }
  func.func @transform_4(%arg0: i32) -> (i32, i32) {
    %c0_i32 = arith.constant 0 : i32
    %c0_i32_0 = arith.constant 0 : i32
    %c0_i32_1 = arith.constant 0 : i32
    return %c0_i32, %c0_i32_0 : i32, i32
  }
  func.func @transform_5(%arg0: i32) -> (i32, i32) {
    %c0_i32 = arith.constant 0 : i32
    %c0_i32_0 = arith.constant 0 : i32
    return %arg0, %c0_i32 : i32, i32
  }
}

</mosaic_0001>

<llo_original>
// kernel: tpu_custom_call.1
$region0: #{tpu_custom_call.1}
  #allocation0 [shape = 'u32[]', space=smem, size = 0x4, offset = 0x4, fixed_abs, tag = 'smem constant byte address 0x4 - core index']
  #allocation1 [shape = 'u32[72,128]{1,0:T(1,128)}', space=vmem, size = 0x9000, scoped, tag = 'internal scratch']
  %s0 = inlined_call_operand.hbm [shape: bf16[8,16,128], index: 0, kind: input, shape index: {}]
  %s1 = inlined_call_operand.vmem [shape: s32[8,1], index: 1, kind: input, shape index: {}]
  %s2 = inlined_call_operand.vmem [shape: s32[8,1], index: 2, kind: input, shape index: {}]
  %s3 = inlined_call_operand.hbm [shape: bf16[256,256], index: 3, kind: input, shape index: {}]
  %s4 = inlined_call_operand.vmem [shape: f32[1,256], index: 4, kind: input, shape index: {}]
  %s5 = inlined_call_operand.hbm [shape: f32[8,256], index: 5, kind: output, shape index: {}]
  %s6 = sld [smem:[#allocation0]]
  $region38: #{tpu_custom_call.1} parent=0
    _
  %s8 = ssub.s32 1, %s6
  %s9 = scalar_select 0, %s8, %s6
  $region1: #{tpu_custom_call.1} parent=0
    #allocation2 [shape = 'u8[32768]{0}', space=vmem, size = 0x8000, scoped, tag = 'input window, operand 0, single buffered']
    #allocation3 [shape = 's32[1]{0}', space=sflag, size = 0x4, scoped, tag = 'scoped memory for tpu_custom_call.1']
    #allocation4 [shape = 's32[1]{0}', space=sflag, size = 0x4, scoped, tag = 'scoped memory for tpu_custom_call.1']
    #allocation5 [shape = 'u8[131072]{0}', space=vmem, size = 0x20000, scoped, tag = 'input window, operand 3, single buffered']
    #allocation6 [shape = 's32[1]{0}', space=sflag, size = 0x4, scoped, tag = 'scoped memory for tpu_custom_call.1']
    #allocation7 [shape = 'u8[8192]{0}', space=vmem, size = 0x2000, scoped, tag = 'output window, operand 0, single buffered']
    %10 = vsyncpa [#allocation3], 0
    %11 = vsyncpa [#allocation6], 0
    %12 = vsyncpa [#allocation4], 0
    // Predicated region
    $region2: #{tpu_custom_call.1} parent=1 // pred_check
      _
    $region3: #{tpu_custom_call.1} parent=1 // pred_check_branch
      %14 = sbr.rel (0) target = $region5
    $region4: #{tpu_custom_call.1} parent=1 // pred_region
      %16 = vsyncadd [#allocation3], 0
      %s17 = sshll.u32 %s0, 4
      %s18 = int_to_ptr.hbm [resolvable:$true] %s17
      %s19 = sshll.u32 [#allocation2], 4
      %s20 = int_to_ptr.vmem [resolvable:$true] %s19
      %25 = dma.hbm_to_vmem [thread:$0]  %s18, 1024, %s20, [#allocation3], 64, 64, 4
    $region5: #{tpu_custom_call.1} parent=1 // pred_fallthru
      _
    // Predicated region
    $region6: #{tpu_custom_call.1} parent=1 // pred_check
      _
    $region7: #{tpu_custom_call.1} parent=1 // pred_check_branch
      %27 = sbr.rel (0) target = $region9
    $region8: #{tpu_custom_call.1} parent=1 // pred_region
      _
    $region9: #{tpu_custom_call.1} parent=1 // pred_fallthru
      _
    // Predicated region
    $region10: #{tpu_custom_call.1} parent=1 // pred_check
      _
    $region11: #{tpu_custom_call.1} parent=1 // pred_check_branch
      %29 = sbr.rel (0) target = $region13
    $region12: #{tpu_custom_call.1} parent=1 // pred_region
      _
    $region13: #{tpu_custom_call.1} parent=1 // pred_fallthru
      _
    // Predicated region
    $region14: #{tpu_custom_call.1} parent=1 // pred_check
      _
    $region15: #{tpu_custom_call.1} parent=1 // pred_check_branch
      %31 = sbr.rel (0) target = $region17
    $region16: #{tpu_custom_call.1} parent=1 // pred_region
      %33 = vsyncadd [#allocation6], 0
      %s34 = sshll.u32 %s3, 4
      %s35 = int_to_ptr.hbm [resolvable:$true] %s34
      %s36 = sshll.u32 [#allocation5], 4
      %s37 = int_to_ptr.vmem [resolvable:$true] %s36
      %42 = dma.hbm_to_vmem [thread:$0]  %s35, 4096, %s37, [#allocation6], 128, 128, 8
    $region17: #{tpu_custom_call.1} parent=1 // pred_fallthru
      _
    // Predicated region
    $region18: #{tpu_custom_call.1} parent=1 // pred_check
      _
    $region19: #{tpu_custom_call.1} parent=1 // pred_check_branch
      %44 = sbr.rel (0) target = $region21
    $region20: #{tpu_custom_call.1} parent=1 // pred_region
      _
    $region21: #{tpu_custom_call.1} parent=1 // pred_fallthru
      _
    // Predicated region
    $region22: #{tpu_custom_call.1} parent=1 // pred_check
      _
    $region23: #{tpu_custom_call.1} parent=1 // pred_check_branch
      %46 = sbr.rel (0) target = $region25
    $region24: #{tpu_custom_call.1} parent=1 // pred_region
      %48 = dma.done [#allocation3], 1024
    $region25: #{tpu_custom_call.1} parent=1 // pred_fallthru
      _
    // Predicated region
    $region26: #{tpu_custom_call.1} parent=1 // pred_check
      _
    $region27: #{tpu_custom_call.1} parent=1 // pred_check_branch
      %50 = sbr.rel (0) target = $region29
    $region28: #{tpu_custom_call.1} parent=1 // pred_region
      %52 = dma.done [#allocation6], 4096
    $region29: #{tpu_custom_call.1} parent=1 // pred_fallthru
      _
    %v53 = vld [vmem:[#allocation2] sm:$0xf]
    %v54 = vld [vmem:[#allocation2 + $0x4] sm:$0xf]
    %v55 = vld [vmem:[#allocation2 + $0x8] sm:$0xf]
    %v56 = vld [vmem:[#allocation2 + $0xc] sm:$0xf]
    %v57 = vld [vmem:[#allocation2 + $0x10] sm:$0xf]
    %v58 = vld [vmem:[#allocation2 + $0x14] sm:$0xf]
    %v59 = vld [vmem:[#allocation2 + $0x18] sm:$0xf]
    %v60 = vld [vmem:[#allocation2 + $0x1c] sm:$0xf]
    %v61 = vld [vmem:[#allocation2 + $0x20] sm:$0xf]
    %v62 = vld [vmem:[#allocation2 + $0x24] sm:$0xf]
    %v63 = vld [vmem:[#allocation2 + $0x28] sm:$0xf]
    %v64 = vld [vmem:[#allocation2 + $0x2c] sm:$0xf]
    %v65 = vld [vmem:[#allocation2 + $0x30] sm:$0xf]
    %v66 = vld [vmem:[#allocation2 + $0x34] sm:$0xf]
    %v67 = vld [vmem:[#allocation2 + $0x38] sm:$0xf]
    %v68 = vld [vmem:[#allocation2 + $0x3c] sm:$0xf]
    %v69 = vunpack.c.l.bf16 %v53
    %v70 = vunpack.c.l.bf16 %v54
    %v71 = vunpack.c.l.bf16 %v55
    %v72 = vunpack.c.l.bf16 %v56
    %v73 = vunpack.c.l.bf16 %v57
    %v74 = vunpack.c.l.bf16 %v58
    %v75 = vunpack.c.l.bf16 %v59
    %v76 = vunpack.c.l.bf16 %v60
    %v77 = vunpack.c.l.bf16 %v61
    %v78 = vunpack.c.l.bf16 %v62
    %v79 = vunpack.c.l.bf16 %v63
    %v80 = vunpack.c.l.bf16 %v64
    %v81 = vunpack.c.l.bf16 %v65
    %v82 = vunpack.c.l.bf16 %v66
    %v83 = vunpack.c.l.bf16 %v67
    %v84 = vunpack.c.l.bf16 %v68
    %v85 = vlaneseq
    %v86 = vand.u32 %v85, 127
    %v87 = vld [vmem:[%s1] sm:$0xff]
    %88 = vset.pattern.permute.xlu0 0
    %89 = vperm.xlu0 %88, %v87
    %v90 = vpop.permute.xlu0 %89
    %vm91 = vcmp.eq.s32.totalorder %v86, %v90
    %v92 = vsel %vm91, 1, 0
    %v93 = vcvt.s32.f32 %v92
    %v94 = vld [vmem:[%s2] sm:$0xff]
    %95 = vset.pattern.permute.xlu0 0
    %96 = vperm.xlu0 %95, %v94
    %v97 = vpop.permute.xlu0 %96
    %vm98 = vcmp.eq.s32.totalorder %v86, %v97
    %v99 = vsel %vm98, 1, 0
    %v100 = vcvt.s32.f32 %v99
    %v101 = vperm.slane %v93, 0
    %v102 = vlaneseq
    %v103 = vshrl.u32 %v102, 7
    %105 = vset.pattern.permute.xlu0 %v103
    %106 = vperm.xlu0 %105, %v101
    %v107 = vpop.permute.xlu0 %106
    %v108 = vlaneseq
    %v109 = vshrl.u32 %v108, 7
    %v110 = vadd.s32 %v109, 8
    %111 = vset.pattern.permute.xlu0 %v110
    %112 = vperm.xlu0 %111, %v101
    %v113 = vpop.permute.xlu0 %112
    %v114 = vperm.slane %v93, 1
    %v115 = vlaneseq
    %v116 = vshrl.u32 %v115, 7
    %118 = vset.pattern.permute.xlu0 %v116
    %119 = vperm.xlu0 %118, %v114
    %v120 = vpop.permute.xlu0 %119
    %v121 = vlaneseq
    %v122 = vshrl.u32 %v121, 7
    %v123 = vadd.s32 %v122, 8
    %124 = vset.pattern.permute.xlu0 %v123
    %125 = vperm.xlu0 %124, %v114
    %v126 = vpop.permute.xlu0 %125
    %v127 = vperm.slane %v93, 2
    %v128 = vlaneseq
    %v129 = vshrl.u32 %v128, 7
    %131 = vset.pattern.permute.xlu0 %v129
    %132 = vperm.xlu0 %131, %v127
    %v133 = vpop.permute.xlu0 %132
    %v134 = vlaneseq
    %v135 = vshrl.u32 %v134, 7
    %v136 = vadd.s32 %v135, 8
    %137 = vset.pattern.permute.xlu0 %v136
    %138 = vperm.xlu0 %137, %v127
    %v139 = vpop.permute.xlu0 %138
    %v140 = vperm.slane %v93, 3
    %v141 = vlaneseq
    %v142 = vshrl.u32 %v141, 7
    %144 = vset.pattern.permute.xlu0 %v142
    %145 = vperm.xlu0 %144, %v140
    %v146 = vpop.permute.xlu0 %145
    %v147 = vlaneseq
    %v148 = vshrl.u32 %v147, 7
    %v149 = vadd.s32 %v148, 8
    %150 = vset.pattern.permute.xlu0 %v149
    %151 = vperm.xlu0 %150, %v140
    %v152 = vpop.permute.xlu0 %151
    %v153 = vperm.slane %v93, 4
    %v154 = vlaneseq
    %v155 = vshrl.u32 %v154, 7
    %157 = vset.pattern.permute.xlu0 %v155
    %158 = vperm.xlu0 %157, %v153
    %v159 = vpop.permute.xlu0 %158
    %v160 = vlaneseq
    %v161 = vshrl.u32 %v160, 7
    %v162 = vadd.s32 %v161, 8
    %163 = vset.pattern.permute.xlu0 %v162
    %164 = vperm.xlu0 %163, %v153
    %v165 = vpop.permute.xlu0 %164
    %v166 = vperm.slane %v93, 5
    %v167 = vlaneseq
    %v168 = vshrl.u32 %v167, 7
    %170 = vset.pattern.permute.xlu0 %v168
    %171 = vperm.xlu0 %170, %v166
    %v172 = vpop.permute.xlu0 %171
    %v173 = vlaneseq
    %v174 = vshrl.u32 %v173, 7
    %v175 = vadd.s32 %v174, 8
    %176 = vset.pattern.permute.xlu0 %v175
    %177 = vperm.xlu0 %176, %v166
    %v178 = vpop.permute.xlu0 %177
    %v179 = vperm.slane %v93, 6
    %v180 = vlaneseq
    %v181 = vshrl.u32 %v180, 7
    %183 = vset.pattern.permute.xlu0 %v181
    %184 = vperm.xlu0 %183, %v179
    %v185 = vpop.permute.xlu0 %184
    %v186 = vlaneseq
    %v187 = vshrl.u32 %v186, 7
    %v188 = vadd.s32 %v187, 8
    %189 = vset.pattern.permute.xlu0 %v188
    %190 = vperm.xlu0 %189, %v179
    %v191 = vpop.permute.xlu0 %190
    %v192 = vperm.slane %v93, 7
    %v193 = vlaneseq
    %v194 = vshrl.u32 %v193, 7
    %196 = vset.pattern.permute.xlu0 %v194
    %197 = vperm.xlu0 %196, %v192
    %v198 = vpop.permute.xlu0 %197
    %v199 = vlaneseq
    %v200 = vshrl.u32 %v199, 7
    %v201 = vadd.s32 %v200, 8
    %202 = vset.pattern.permute.xlu0 %v201
    %203 = vperm.xlu0 %202, %v192
    %v204 = vpop.permute.xlu0 %203
    %v205 = vmul.f32 %v107, %v69
    %v206 = vmul.f32 %v113, %v70
    %v207 = vmul.f32 %v120, %v71
    %v208 = vmul.f32 %v126, %v72
    %v209 = vmul.f32 %v133, %v73
    %v210 = vmul.f32 %v139, %v74
    %v211 = vmul.f32 %v146, %v75
    %v212 = vmul.f32 %v152, %v76
    %v213 = vmul.f32 %v159, %v77
    %v214 = vmul.f32 %v165, %v78
    %v215 = vmul.f32 %v172, %v79
    %v216 = vmul.f32 %v178, %v80
    %v217 = vmul.f32 %v185, %v81
    %v218 = vmul.f32 %v191, %v82
    %v219 = vmul.f32 %v198, %v83
    %v220 = vmul.f32 %v204, %v84
    %v221 = vadd.f32 %v205, %v206
    %v222 = vrot.slane %v221, 4
    %v223 = vadd.f32 %v221, %v222
    %v224 = vrot.slane %v223, 2
    %v225 = vadd.f32 %v223, %v224
    %v226 = vrot.slane %v225, 1
    %v227 = vadd.f32 %v225, %v226
    %v228 = vadd.f32 %v207, %v208
    %v229 = vrot.slane %v228, 4
    %v230 = vadd.f32 %v228, %v229
    %v231 = vrot.slane %v230, 2
    %v232 = vadd.f32 %v230, %v231
    %v233 = vrot.slane %v232, 1
    %v234 = vadd.f32 %v232, %v233
    %v235 = vadd.f32 %v209, %v210
    %v236 = vrot.slane %v235, 4
    %v237 = vadd.f32 %v235, %v236
    %v238 = vrot.slane %v237, 2
    %v239 = vadd.f32 %v237, %v238
    %v240 = vrot.slane %v239, 1
    %v241 = vadd.f32 %v239, %v240
    %v242 = vadd.f32 %v211, %v212
    %v243 = vrot.slane %v242, 4
    %v244 = vadd.f32 %v242, %v243
    %v245 = vrot.slane %v244, 2
    %v246 = vadd.f32 %v244, %v245
    %v247 = vrot.slane %v246, 1
    %v248 = vadd.f32 %v246, %v247
    %v249 = vadd.f32 %v213, %v214
    %v250 = vrot.slane %v249, 4
    %v251 = vadd.f32 %v249, %v250
    %v252 = vrot.slane %v251, 2
    %v253 = vadd.f32 %v251, %v252
    %v254 = vrot.slane %v253, 1
    %v255 = vadd.f32 %v253, %v254
    %v256 = vadd.f32 %v215, %v216
    %v257 = vrot.slane %v256, 4
    %v258 = vadd.f32 %v256, %v257
    %v259 = vrot.slane %v258, 2
    %v260 = vadd.f32 %v258, %v259
    %v261 = vrot.slane %v260, 1
    %v262 = vadd.f32 %v260, %v261
    %v263 = vadd.f32 %v217, %v218
    %v264 = vrot.slane %v263, 4
    %v265 = vadd.f32 %v263, %v264
    %v266 = vrot.slane %v265, 2
    %v267 = vadd.f32 %v265, %v266
    %v268 = vrot.slane %v267, 1
    %v269 = vadd.f32 %v267, %v268
    %v270 = vadd.f32 %v219, %v220
    %v271 = vrot.slane %v270, 4
    %v272 = vadd.f32 %v270, %v271
    %v273 = vrot.slane %v272, 2
    %v274 = vadd.f32 %v272, %v273
    %v275 = vrot.slane %v274, 1
    %v276 = vadd.f32 %v274, %v275
    %v277 = vperm.slane %v100, 0
    %v278 = vlaneseq
    %v279 = vshrl.u32 %v278, 7
    %281 = vset.pattern.permute.xlu0 %v279
    %282 = vperm.xlu0 %281, %v277
    %v283 = vpop.permute.xlu0 %282
    %v284 = vlaneseq
    %v285 = vshrl.u32 %v284, 7
    %v286 = vadd.s32 %v285, 8
    %287 = vset.pattern.permute.xlu0 %v286
    %288 = vperm.xlu0 %287, %v277
    %v289 = vpop.permute.xlu0 %288
    %v290 = vperm.slane %v100, 1
    %v291 = vlaneseq
    %v292 = vshrl.u32 %v291, 7
    %294 = vset.pattern.permute.xlu0 %v292
    %295 = vperm.xlu0 %294, %v290
    %v296 = vpop.permute.xlu0 %295
    %v297 = vlaneseq
    %v298 = vshrl.u32 %v297, 7
    %v299 = vadd.s32 %v298, 8
    %300 = vset.pattern.permute.xlu0 %v299
    %301 = vperm.xlu0 %300, %v290
    %v302 = vpop.permute.xlu0 %301
    %v303 = vperm.slane %v100, 2
    %v304 = vlaneseq
    %v305 = vshrl.u32 %v304, 7
    %307 = vset.pattern.permute.xlu0 %v305
    %308 = vperm.xlu0 %307, %v303
    %v309 = vpop.permute.xlu0 %308
    %v310 = vlaneseq
    %v311 = vshrl.u32 %v310, 7
    %v312 = vadd.s32 %v311, 8
    %313 = vset.pattern.permute.xlu0 %v312
    %314 = vperm.xlu0 %313, %v303
    %v315 = vpop.permute.xlu0 %314
    %v316 = vperm.slane %v100, 3
    %v317 = vlaneseq
    %v318 = vshrl.u32 %v317, 7
    %320 = vset.pattern.permute.xlu0 %v318
    %321 = vperm.xlu0 %320, %v316
    %v322 = vpop.permute.xlu0 %321
    %v323 = vlaneseq
    %v324 = vshrl.u32 %v323, 7
    %v325 = vadd.s32 %v324, 8
    %326 = vset.pattern.permute.xlu0 %v325
    %327 = vperm.xlu0 %326, %v316
    %v328 = vpop.permute.xlu0 %327
    %v329 = vperm.slane %v100, 4
    %v330 = vlaneseq
    %v331 = vshrl.u32 %v330, 7
    %333 = vset.pattern.permute.xlu0 %v331
    %334 = vperm.xlu0 %333, %v329
    %v335 = vpop.permute.xlu0 %334
    %v336 = vlaneseq
    %v337 = vshrl.u32 %v336, 7
    %v338 = vadd.s32 %v337, 8
    %339 = vset.pattern.permute.xlu0 %v338
    %340 = vperm.xlu0 %339, %v329
    %v341 = vpop.permute.xlu0 %340
    %v342 = vperm.slane %v100, 5
    %v343 = vlaneseq
    %v344 = vshrl.u32 %v343, 7
    %346 = vset.pattern.permute.xlu0 %v344
    %347 = vperm.xlu0 %346, %v342
    %v348 = vpop.permute.xlu0 %347
    %v349 = vlaneseq
    %v350 = vshrl.u32 %v349, 7
    %v351 = vadd.s32 %v350, 8
    %352 = vset.pattern.permute.xlu0 %v351
    %353 = vperm.xlu0 %352, %v342
    %v354 = vpop.permute.xlu0 %353
    %v355 = vperm.slane %v100, 6
    %v356 = vlaneseq
    %v357 = vshrl.u32 %v356, 7
    %359 = vset.pattern.permute.xlu0 %v357
    %360 = vperm.xlu0 %359, %v355
    %v361 = vpop.permute.xlu0 %360
    %v362 = vlaneseq
    %v363 = vshrl.u32 %v362, 7
    %v364 = vadd.s32 %v363, 8
    %365 = vset.pattern.permute.xlu0 %v364
    %366 = vperm.xlu0 %365, %v355
    %v367 = vpop.permute.xlu0 %366
    %v368 = vperm.slane %v100, 7
    %v369 = vlaneseq
    %v370 = vshrl.u32 %v369, 7
    %372 = vset.pattern.permute.xlu0 %v370
    %373 = vperm.xlu0 %372, %v368
    %v374 = vpop.permute.xlu0 %373
    %v375 = vlaneseq
    %v376 = vshrl.u32 %v375, 7
    %v377 = vadd.s32 %v376, 8
    %378 = vset.pattern.permute.xlu0 %v377
    %379 = vperm.xlu0 %378, %v368
    %v380 = vpop.permute.xlu0 %379
    %v381 = vmul.f32 %v283, %v69
    %v382 = vmul.f32 %v289, %v70
    %v383 = vmul.f32 %v296, %v71
    %v384 = vmul.f32 %v302, %v72
    %v385 = vmul.f32 %v309, %v73
    %v386 = vmul.f32 %v315, %v74
    %v387 = vmul.f32 %v322, %v75
    %v388 = vmul.f32 %v328, %v76
    %v389 = vmul.f32 %v335, %v77
    %v390 = vmul.f32 %v341, %v78
    %v391 = vmul.f32 %v348, %v79
    %v392 = vmul.f32 %v354, %v80
    %v393 = vmul.f32 %v361, %v81
    %v394 = vmul.f32 %v367, %v82
    %v395 = vmul.f32 %v374, %v83
    %v396 = vmul.f32 %v380, %v84
    %v397 = vadd.f32 %v381, %v382
    %v398 = vrot.slane %v397, 4
    %v399 = vadd.f32 %v397, %v398
    %v400 = vrot.slane %v399, 2
    %v401 = vadd.f32 %v399, %v400
    %v402 = vrot.slane %v401, 1
    %v403 = vadd.f32 %v401, %v402
    %v404 = vadd.f32 %v383, %v384
    %v405 = vrot.slane %v404, 4
    %v406 = vadd.f32 %v404, %v405
    %v407 = vrot.slane %v406, 2
    %v408 = vadd.f32 %v406, %v407
    %v409 = vrot.slane %v408, 1
    %v410 = vadd.f32 %v408, %v409
    %v411 = vadd.f32 %v385, %v386
    %v412 = vrot.slane %v411, 4
    %v413 = vadd.f32 %v411, %v412
    %v414 = vrot.slane %v413, 2
    %v415 = vadd.f32 %v413, %v414
    %v416 = vrot.slane %v415, 1
    %v417 = vadd.f32 %v415, %v416
    %v418 = vadd.f32 %v387, %v388
    %v419 = vrot.slane %v418, 4
    %v420 = vadd.f32 %v418, %v419
    %v421 = vrot.slane %v420, 2
    %v422 = vadd.f32 %v420, %v421
    %v423 = vrot.slane %v422, 1
    %v424 = vadd.f32 %v422, %v423
    %v425 = vadd.f32 %v389, %v390
    %v426 = vrot.slane %v425, 4
    %v427 = vadd.f32 %v425, %v426
    %v428 = vrot.slane %v427, 2
    %v429 = vadd.f32 %v427, %v428
    %v430 = vrot.slane %v429, 1
    %v431 = vadd.f32 %v429, %v430
    %v432 = vadd.f32 %v391, %v392
    %v433 = vrot.slane %v432, 4
    %v434 = vadd.f32 %v432, %v433
    %v435 = vrot.slane %v434, 2
    %v436 = vadd.f32 %v434, %v435
    %v437 = vrot.slane %v436, 1
    %v438 = vadd.f32 %v436, %v437
    %v439 = vadd.f32 %v393, %v394
    %v440 = vrot.slane %v439, 4
    %v441 = vadd.f32 %v439, %v440
    %v442 = vrot.slane %v441, 2
    %v443 = vadd.f32 %v441, %v442
    %v444 = vrot.slane %v443, 1
    %v445 = vadd.f32 %v443, %v444
    %v446 = vadd.f32 %v395, %v396
    %v447 = vrot.slane %v446, 4
    %v448 = vadd.f32 %v446, %v447
    %v449 = vrot.slane %v448, 2
    %v450 = vadd.f32 %v448, %v449
    %v451 = vrot.slane %v450, 1
    %v452 = vadd.f32 %v450, %v451
    %v453 = vpack.c.bf16 %v227, %v227
    %v454 = vpack.c.bf16 %v234, %v234
    %v455 = vpack.c.bf16 %v241, %v241
    %v456 = vpack.c.bf16 %v248, %v248
    %v457 = vpack.c.bf16 %v255, %v255
    %v458 = vpack.c.bf16 %v262, %v262
    %v459 = vpack.c.bf16 %v269, %v269
    %v460 = vpack.c.bf16 %v276, %v276
    %v461 = vpack.c.bf16 %v403, %v403
    %v462 = vpack.c.bf16 %v410, %v410
    %v463 = vpack.c.bf16 %v417, %v417
    %v464 = vpack.c.bf16 %v424, %v424
    %v465 = vpack.c.bf16 %v431, %v431
    %v466 = vpack.c.bf16 %v438, %v438
    %v467 = vpack.c.bf16 %v445, %v445
    %v468 = vpack.c.bf16 %v452, %v452
    %v469 = vld [vmem:[#allocation5] sm:$0xff]
    %v470 = vld [vmem:[#allocation5 + $0x8] sm:$0xff]
    %v471 = vld [vmem:[#allocation5 + $0x10] sm:$0xff]
    %v472 = vld [vmem:[#allocation5 + $0x18] sm:$0xff]
    %v473 = vld [vmem:[#allocation5 + $0x20] sm:$0xff]
    %v474 = vld [vmem:[#allocation5 + $0x28] sm:$0xff]
    %v475 = vld [vmem:[#allocation5 + $0x30] sm:$0xff]
    %v476 = vld [vmem:[#allocation5 + $0x38] sm:$0xff]
    %v477 = vld [vmem:[#allocation5 + $0x40] sm:$0xff]
    %v478 = vld [vmem:[#allocation5 + $0x48] sm:$0xff]
    %v479 = vld [vmem:[#allocation5 + $0x50] sm:$0xff]
    %v480 = vld [vmem:[#allocation5 + $0x58] sm:$0xff]
    %v481 = vld [vmem:[#allocation5 + $0x60] sm:$0xff]
    %v482 = vld [vmem:[#allocation5 + $0x68] sm:$0xff]
    %v483 = vld [vmem:[#allocation5 + $0x70] sm:$0xff]
    %v484 = vld [vmem:[#allocation5 + $0x78] sm:$0xff]
    %v485 = vld [vmem:[#allocation5 + $0x80] sm:$0xff]
    %v486 = vld [vmem:[#allocation5 + $0x88] sm:$0xff]
    %v487 = vld [vmem:[#allocation5 + $0x90] sm:$0xff]
    %v488 = vld [vmem:[#allocation5 + $0x98] sm:$0xff]
    %v489 = vld [vmem:[#allocation5 + $0xa0] sm:$0xff]
    %v490 = vld [vmem:[#allocation5 + $0xa8] sm:$0xff]
    %v491 = vld [vmem:[#allocation5 + $0xb0] sm:$0xff]
    %v492 = vld [vmem:[#allocation5 + $0xb8] sm:$0xff]
    %v493 = vld [vmem:[#allocation5 + $0xc0] sm:$0xff]
    %v494 = vld [vmem:[#allocation5 + $0xc8] sm:$0xff]
    %v495 = vld [vmem:[#allocation5 + $0xd0] sm:$0xff]
    %v496 = vld [vmem:[#allocation5 + $0xd8] sm:$0xff]
    %v497 = vld [vmem:[#allocation5 + $0xe0] sm:$0xff]
    %v498 = vld [vmem:[#allocation5 + $0xe8] sm:$0xff]
    %v499 = vld [vmem:[#allocation5 + $0xf0] sm:$0xff]
    %v500 = vld [vmem:[#allocation5 + $0xf8] sm:$0xff]
    %v509 = vunpack.c.l.b16 %v461
    %v510 = vunpack.c.l.b16 %v462
    %v511 = vunpack.c.l.b16 %v463
    %v512 = vunpack.c.l.b16 %v464
    %v513 = vunpack.c.l.b16 %v465
    %v514 = vunpack.c.l.b16 %v466
    %v515 = vunpack.c.l.b16 %v467
    %v516 = vunpack.c.l.b16 %v468
    %vm517 = vcmask 1041409
    %v518 = vsel %vm517, %v510, %v509
    %vm519 = vcmask 1042434
    %v520 = vsel %vm519, %v511, %v518
    %vm521 = vcmask 1043459
    %v522 = vsel %vm521, %v512, %v520
    %vm523 = vcmask 1044484
    %v524 = vsel %vm523, %v513, %v522
    %vm525 = vcmask 1045509
    %v526 = vsel %vm525, %v514, %v524
    %vm527 = vcmask 1046534
    %v528 = vsel %vm527, %v515, %v526
    %vm529 = vcmask 1047559
    %v530 = vsel %vm529, %v516, %v528
    %v531 = vpack.c.b16 %v530, %v530
    %v549 = vunpack.c.l.b16 %v485
    %v550 = vunpack.c.h.b16 %v485
    %v551 = vunpack.c.l.b16 %v486
    %v552 = vunpack.c.h.b16 %v486
    %v553 = vunpack.c.l.b16 %v487
    %v554 = vunpack.c.h.b16 %v487
    %v555 = vunpack.c.l.b16 %v488
    %v556 = vunpack.c.h.b16 %v488
    %v557 = vunpack.c.l.b16 %v489
    %v558 = vunpack.c.h.b16 %v489
    %v559 = vunpack.c.l.b16 %v490
    %v560 = vunpack.c.h.b16 %v490
    %v561 = vunpack.c.l.b16 %v491
    %v562 = vunpack.c.h.b16 %v491
    %v563 = vunpack.c.l.b16 %v492
    %v564 = vunpack.c.h.b16 %v492
    %v565 = vunpack.c.l.b16 %v493
    %v566 = vunpack.c.h.b16 %v493
    %v567 = vunpack.c.l.b16 %v494
    %v568 = vunpack.c.h.b16 %v494
    %v569 = vunpack.c.l.b16 %v495
    %v570 = vunpack.c.h.b16 %v495
    %v571 = vunpack.c.l.b16 %v496
    %v572 = vunpack.c.h.b16 %v496
    %v573 = vunpack.c.l.b16 %v497
    %v574 = vunpack.c.h.b16 %v497
    %v575 = vunpack.c.l.b16 %v498
    %v576 = vunpack.c.h.b16 %v498
    %v577 = vunpack.c.l.b16 %v499
    %v578 = vunpack.c.h.b16 %v499
    %v579 = vunpack.c.l.b16 %v500
    %v580 = vunpack.c.h.b16 %v500
    %v581 = vpack.c.b16 %v551, %v549
    %v582 = vpack.c.b16 %v552, %v550
    %v583 = vpack.c.b16 %v555, %v553
    %v584 = vpack.c.b16 %v556, %v554
    %v585 = vpack.c.b16 %v559, %v557
    %v586 = vpack.c.b16 %v560, %v558
    %v587 = vpack.c.b16 %v563, %v561
    %v588 = vpack.c.b16 %v564, %v562
    %v589 = vpack.c.b16 %v567, %v565
    %v590 = vpack.c.b16 %v568, %v566
    %v591 = vpack.c.b16 %v571, %v569
    %v592 = vpack.c.b16 %v572, %v570
    %v593 = vpack.c.b16 %v575, %v573
    %v594 = vpack.c.b16 %v576, %v574
    %v595 = vpack.c.b16 %v579, %v577
    %v596 = vpack.c.b16 %v580, %v578
    %613 = vmatpush.bf16.msra.mxu0 %v595
    %614 = vmatpush.bf16.msra.mxu0 %v593
    %615 = vmatpush.bf16.msra.mxu0 %v591
    %616 = vmatpush.bf16.msra.mxu0 %v589
    %617 = vmatpush.bf16.msra.mxu0 %v587
    %618 = vmatpush.bf16.msra.mxu0 %v585
    %619 = vmatpush.bf16.msra.mxu0 %v583
    %620 = vmatpush.bf16.msra.mxu0 %v581
    %621 = vmatmul.bf16.gmra.mxu0 %v531
    %v622 = vpop.f32.mrf.mxu0
    %v623 = vadd.f32 0.0, %v622
    %v624 = vpop.f32.mrf.mxu0
    %625 = vdwg.mxu0
    %626 = vmatpush.bf16.msra.mxu0 %v596
    %627 = vmatpush.bf16.msra.mxu0 %v594
    %628 = vmatpush.bf16.msra.mxu0 %v592
    %629 = vmatpush.bf16.msra.mxu0 %v590
    %630 = vmatpush.bf16.msra.mxu0 %v588
    %631 = vmatpush.bf16.msra.mxu0 %v586
    %632 = vmatpush.bf16.msra.mxu0 %v584
    %633 = vmatpush.bf16.msra.mxu0 %v582
    %634 = vmatmul.bf16.gmra.mxu0 %v531
    %v635 = vpop.f32.mrf.mxu0
    %v636 = vadd.f32 0.0, %v635
    %v637 = vpop.f32.mrf.mxu0
    %638 = vdwg.mxu0
    %v647 = vunpack.c.l.b16 %v453
    %v648 = vunpack.c.l.b16 %v454
    %v649 = vunpack.c.l.b16 %v455
    %v650 = vunpack.c.l.b16 %v456
    %v651 = vunpack.c.l.b16 %v457
    %v652 = vunpack.c.l.b16 %v458
    %v653 = vunpack.c.l.b16 %v459
    %v654 = vunpack.c.l.b16 %v460
    %v655 = vsel %vm517, %v648, %v647
    %v656 = vsel %vm519, %v649, %v655
    %v657 = vsel %vm521, %v650, %v656
    %v658 = vsel %vm523, %v651, %v657
    %v659 = vsel %vm525, %v652, %v658
    %v660 = vsel %vm527, %v653, %v659
    %v661 = vsel %vm529, %v654, %v660
    %v662 = vpack.c.b16 %v661, %v661
    %v680 = vunpack.c.l.b16 %v469
    %v681 = vunpack.c.h.b16 %v469
    %v682 = vunpack.c.l.b16 %v470
    %v683 = vunpack.c.h.b16 %v470
    %v684 = vunpack.c.l.b16 %v471
    %v685 = vunpack.c.h.b16 %v471
    %v686 = vunpack.c.l.b16 %v472
    %v687 = vunpack.c.h.b16 %v472
    %v688 = vunpack.c.l.b16 %v473
    %v689 = vunpack.c.h.b16 %v473
    %v690 = vunpack.c.l.b16 %v474
    %v691 = vunpack.c.h.b16 %v474
    %v692 = vunpack.c.l.b16 %v475
    %v693 = vunpack.c.h.b16 %v475
    %v694 = vunpack.c.l.b16 %v476
    %v695 = vunpack.c.h.b16 %v476
    %v696 = vunpack.c.l.b16 %v477
    %v697 = vunpack.c.h.b16 %v477
    %v698 = vunpack.c.l.b16 %v478
    %v699 = vunpack.c.h.b16 %v478
    %v700 = vunpack.c.l.b16 %v479
    %v701 = vunpack.c.h.b16 %v479
    %v702 = vunpack.c.l.b16 %v480
    %v703 = vunpack.c.h.b16 %v480
    %v704 = vunpack.c.l.b16 %v481
    %v705 = vunpack.c.h.b16 %v481
    %v706 = vunpack.c.l.b16 %v482
    %v707 = vunpack.c.h.b16 %v482
    %v708 = vunpack.c.l.b16 %v483
    %v709 = vunpack.c.h.b16 %v483
    %v710 = vunpack.c.l.b16 %v484
    %v711 = vunpack.c.h.b16 %v484
    %v712 = vpack.c.b16 %v682, %v680
    %v713 = vpack.c.b16 %v683, %v681
    %v714 = vpack.c.b16 %v686, %v684
    %v715 = vpack.c.b16 %v687, %v685
    %v716 = vpack.c.b16 %v690, %v688
    %v717 = vpack.c.b16 %v691, %v689
    %v718 = vpack.c.b16 %v694, %v692
    %v719 = vpack.c.b16 %v695, %v693
    %v720 = vpack.c.b16 %v698, %v696
    %v721 = vpack.c.b16 %v699, %v697
    %v722 = vpack.c.b16 %v702, %v700
    %v723 = vpack.c.b16 %v703, %v701
    %v724 = vpack.c.b16 %v706, %v704
    %v725 = vpack.c.b16 %v707, %v705
    %v726 = vpack.c.b16 %v710, %v708
    %v727 = vpack.c.b16 %v711, %v709
    %744 = vmatpush.bf16.msra.mxu0 %v726
    %745 = vmatpush.bf16.msra.mxu0 %v724
    %746 = vmatpush.bf16.msra.mxu0 %v722
    %747 = vmatpush.bf16.msra.mxu0 %v720
    %748 = vmatpush.bf16.msra.mxu0 %v718
    %749 = vmatpush.bf16.msra.mxu0 %v716
    %750 = vmatpush.bf16.msra.mxu0 %v714
    %751 = vmatpush.bf16.msra.mxu0 %v712
    %752 = vmatmul.bf16.gmra.mxu0 %v662
    %v753 = vpop.f32.mrf.mxu0
    %v754 = vadd.f32 %v623, %v753
    %v755 = vpop.f32.mrf.mxu0
    %756 = vdwg.mxu0
    %757 = vmatpush.bf16.msra.mxu0 %v727
    %758 = vmatpush.bf16.msra.mxu0 %v725
    %759 = vmatpush.bf16.msra.mxu0 %v723
    %760 = vmatpush.bf16.msra.mxu0 %v721
    %761 = vmatpush.bf16.msra.mxu0 %v719
    %762 = vmatpush.bf16.msra.mxu0 %v717
    %763 = vmatpush.bf16.msra.mxu0 %v715
    %764 = vmatpush.bf16.msra.mxu0 %v713
    %765 = vmatmul.bf16.gmra.mxu0 %v662
    %v766 = vpop.f32.mrf.mxu0
    %v767 = vadd.f32 %v636, %v766
    %v768 = vpop.f32.mrf.mxu0
    %769 = vdwg.mxu0
    %v770 = vld [vmem:[%s4] sm:$0x3]
    %v772 = vperm.slane %v770, 0
    %v773 = vperm.slane %v770, 1
    %v776 = vadd.f32 %v754, %v772
    %v777 = vadd.f32 %v767, %v773
    %778 = vst [vmem:[#allocation7] sm:$0xff] %v776
    %779 = vst [vmem:[#allocation7 + $0x8] sm:$0xff] %v777
    // Predicated region
    $region30: #{tpu_custom_call.1} parent=1 // pred_check
      _
    $region31: #{tpu_custom_call.1} parent=1 // pred_check_branch
      %781 = sbr.rel (0) target = $region33
    $region32: #{tpu_custom_call.1} parent=1 // pred_region
      %783 = vsyncadd [#allocation4], 0
      %s785 = sshll.u32 [#allocation7], 4
      %s786 = int_to_ptr.vmem [resolvable:$true] %s785
      %s787 = sshll.u32 %s5, 4
      %s788 = int_to_ptr.hbm [resolvable:$true] %s787
      %790 = dma.vmem_to_hbm [thread:$0]  %s786, 256, %s788, [#allocation4]
    $region33: #{tpu_custom_call.1} parent=1 // pred_fallthru
      _
    // Predicated region
    $region34: #{tpu_custom_call.1} parent=1 // pred_check
      _
    $region35: #{tpu_custom_call.1} parent=1 // pred_check_branch
      %792 = sbr.rel (0) target = $region37
    $region36: #{tpu_custom_call.1} parent=1 // pred_region
      %794 = dma.done [#allocation4], 256
    $region37: #{tpu_custom_call.1} parent=1 // pred_fallthru
      _
    %795 = vsyncpa [#allocation3], 1
    %796 = vsyncpa [#allocation6], 1
    %797 = vsyncpa [#allocation4], 1

</llo_original>
